<compile_context>
chip_gen: v7x
topology: tpu7x:2x2x1
jax: 0.10.0
libtpu: 0.0.40
codegen_flags: <defaults>
</compile_context>

<pallas_src>
import functools
from collections import OrderedDict

import numpy as np
import jax
import jax.numpy as jnp
from jax.experimental import pallas as pl
from jax.experimental.pallas import tpu as pltpu

_LANE = 128
_SUBLANE_BF16 = 16          # bf16 vregs pack 16 rows
_NEG_INF = -1e30


def _round_up(n, m):
    return ((n + m - 1) // m) * m


def _make_ensemble_kernel(cb, h1, h2, kp):
    """Kernel processing `cb` classifiers per grid step (statically unrolled)."""

    def kernel(x_ref, w1_ref, w2_ref, w3_ref, bias_ref, lab_ref, roww_ref,
               logits_ref, loss_ref):
        x = x_ref[...]                      # (B_pad, D_pad) bf16, resident across grid
        row_w = roww_ref[...]               # (B_pad, 1) f32, resident
        bias = bias_ref[...]                # (cb, 1, h1+h2+kp) f32; b3 holds -1e30 pad cols

        for c in range(cb):                 # static unroll: one MXU chain per classifier
            b1 = bias[c, :, :h1]
            b2 = bias[c, :, h1:h1 + h2]
            b3 = bias[c, :, h1 + h2:]       # class-pad mask folded into bias

            a1 = jnp.dot(x, w1_ref[c], preferred_element_type=jnp.float32) + b1
            a1 = jnp.maximum(a1, 0.01 * a1)                       # LeakyReLU(0.01)
            a2 = jnp.dot(a1.astype(jnp.bfloat16), w2_ref[c],
                         preferred_element_type=jnp.float32) + b2
            a2 = jnp.maximum(a2, 0.01 * a2)
            logits = jnp.dot(a2.astype(jnp.bfloat16), w3_ref[c],
                             preferred_element_type=jnp.float32) + b3   # (B_pad, kp) f32
            logits_ref[c] = logits

            # Mean cross-entropy with integer targets.  Padded class columns are -1e30
            # (folded into b3); padded batch rows have row_w == 0.
            m = jnp.max(logits, axis=-1, keepdims=True)
            lse = m + jnp.log(jnp.sum(jnp.exp(logits - m), axis=-1, keepdims=True))
            labels = lab_ref[c]                                   # (B_pad, 1) int32
            col = jax.lax.broadcasted_iota(jnp.int32, logits.shape, 1)
            onehot = (col == labels).astype(jnp.float32)
            picked = jnp.sum(onehot * logits, axis=-1, keepdims=True)  # (B_pad, 1)
            per_example = (lse - picked) * row_w
            loss_ref[c] = jnp.sum(per_example, axis=0, keepdims=True)  # (1, 1)

    return kernel


@functools.partial(jax.jit, static_argnames=("cb",))
def _ensemble_forward(x, w1, w2, w3, bias_pack, labels, row_w, *, cb):
    c_pad, d_pad, h1 = w1.shape
    h2 = w2.shape[2]
    kp = w3.shape[2]
    b_pad = x.shape[0]
    num_blocks = c_pad // cb

    const2d = lambda b: (0, 0)
    per_blk = lambda b: (b, 0, 0)

    flops = 2 * c_pad * b_pad * (d_pad * h1 + h1 * h2 + h2 * kp)
    transcendentals = c_pad * b_pad * (kp + 1)
    bytes_accessed = int(
        sum(a.size * a.dtype.itemsize
            for a in (x, w1, w2, w3, bias_pack, labels, row_w))
        + c_pad * b_pad * kp * 4 + c_pad * 4)

    logits, losses = pl.pallas_call(
        _make_ensemble_kernel(cb, h1, h2, kp),
        out_shape=(
            jax.ShapeDtypeStruct((c_pad, b_pad, kp), jnp.float32),
            jax.ShapeDtypeStruct((c_pad, 1, 1), jnp.float32),
        ),
        grid_spec=pltpu.PrefetchScalarGridSpec(
            num_scalar_prefetch=0,
            grid=(num_blocks,),
            in_specs=[
                pl.BlockSpec((b_pad, d_pad), const2d),            # x: resident
                pl.BlockSpec((cb, d_pad, h1), per_blk),           # W1 block
                pl.BlockSpec((cb, h1, h2), per_blk),              # W2 block
                pl.BlockSpec((cb, h2, kp), per_blk),              # W3 block
                pl.BlockSpec((cb, 1, h1 + h2 + kp), per_blk),     # packed b1|b2|b3(+mask)
                pl.BlockSpec((cb, b_pad, 1), per_blk),            # labels
                pl.BlockSpec((b_pad, 1), const2d),                # row weights: resident
            ],
            out_specs=(
                pl.BlockSpec((cb, b_pad, kp), per_blk),           # logits (lane-dense)
                pl.BlockSpec((cb, 1, 1), per_blk),                # per-classifier losses
            ),
        ),
        compiler_params=pltpu.CompilerParams(
            dimension_semantics=("parallel",)),
        cost_estimate=pl.CostEstimate(
            flops=flops, transcendentals=transcendentals,
            bytes_accessed=bytes_accessed),
    )(x, w1, w2, w3, bias_pack, labels, row_w)
    return logits, losses


def init_classifier_params(key, layer_sizes):
    """Deterministic init mimicking torch.nn.Linear defaults; weights stored (in, out)."""
    params = []
    for i in range(len(layer_sizes) - 1):
        key, kw, kb = jax.random.split(key, 3)
        fan_in, fan_out = layer_sizes[i], layer_sizes[i + 1]
        bound = 1.0 / float(np.sqrt(fan_in))
        w = jax.random.uniform(kw, (fan_in, fan_out), jnp.float32, -bound, bound)
        b = jax.random.uniform(kb, (1, fan_out), jnp.float32, -bound, bound)
        params.append((w, b))
    return params


class ClassifierEnsemblePallas:
    """JAX/Pallas equivalent of ClassifierEnsemble (MultinomialClassifier members,
    batch_norm=False, dropout=None, bias=True, LeakyReLU hidden activation)."""

    def __init__(self, layers, cluster_label_dict, key, minimum_agreement=0.01):
        assert len(layers) == 3, "fused kernel assumes layers = [input_dim, hidden1, hidden2]"
        # TODO(synk): batch_norm / dropout options and arbitrary-depth FullyConnectedBlock
        # are not implemented in the fused kernel (module defaults are used).
        self.layers = list(layers)
        self.minimum_agreement = minimum_agreement
        self.names = list(cluster_label_dict.keys())
        self.cluster_label_dict = OrderedDict(
            (n, jnp.asarray(v, dtype=jnp.int32)) for n, v in cluster_label_dict.items())

        # Number of classes per classifier = number of distinct cluster labels (as in torch).
        self.output_dims = OrderedDict()
        for n, v in cluster_label_dict.items():
            arr = np.asarray(v)
            uniq = np.unique(arr)
            # CE picks logit column `label`; require contiguous ids in [0, K) as torch does.
            assert uniq[0] == 0 and uniq[-1] == uniq.size - 1, \
                f"cluster labels for {n} must be contiguous ids in [0, K)"
            self.output_dims[n] = int(uniq.size)

        params = OrderedDict()
        for n in self.names:
            key, sub = jax.random.split(key)
            params[n] = init_classifier_params(sub, self.layers + [self.output_dims[n]])
        self.params = params

        self._build_stacked()

    def _build_stacked(self):
        D0, H1, H2 = self.layers
        self.d_pad = _round_up(D0, _LANE)
        self.h1_pad = _round_up(H1, _LANE)
        self.h2_pad = _round_up(H2, _LANE)
        self.k_pad = _round_up(max(self.output_dims.values()), _LANE)

        # Block the classifier axis: <=8 classifiers per grid step, balanced across blocks.
        C = len(self.names)
        num_blocks = -(-C // 8)
        self.cb = -(-C // num_blocks)
        self.c_pad = self.cb * num_blocks
        # NOTE(v7x): with >1 block, an even block count balances the two TensorCores.

        def pad2(a, r, c, fill=0.0):
            out = np.full((r, c), fill, np.float32)
            a = np.asarray(a, np.float32)
            out[:a.shape[0], :a.shape[1]] = a
            return out

        w1s, w2s, w3s, biases = [], [], [], []
        for n in self.names:
            (w1, b1), (w2, b2), (w3, b3) = self.params[n]
            w1s.append(pad2(w1, self.d_pad, self.h1_pad))
            w2s.append(pad2(w2, self.h1_pad, self.h2_pad))
            w3s.append(pad2(w3, self.h2_pad, self.k_pad))
            b1p = pad2(b1, 1, self.h1_pad)
            b2p = pad2(b2, 1, self.h2_pad)
            b3p = pad2(b3, 1, self.k_pad, fill=_NEG_INF)   # class-pad mask folded into b3
            biases.append(np.concatenate([b1p, b2p, b3p], axis=1))

        # Pad the classifier axis by replicating classifier 0 (its outputs are discarded).
        for _ in range(self.c_pad - C):
            w1s.append(w1s[0]); w2s.append(w2s[0]); w3s.append(w3s[0])
            biases.append(biases[0])

        # bf16 matmul operands (MXU-native on v6e/v7x), f32 packed biases.
        self.w1 = jnp.asarray(np.stack(w1s), jnp.bfloat16)
        self.w2 = jnp.asarray(np.stack(w2s), jnp.bfloat16)
        self.w3 = jnp.asarray(np.stack(w3s), jnp.bfloat16)
        self.bias_pack = jnp.asarray(np.stack(biases), jnp.float32)

        # Stack all label tables once so the per-batch gather is a single op.
        tbl = np.stack([np.asarray(self.cluster_label_dict[n]) for n in self.names], axis=0)
        if self.c_pad > C:
            tbl = np.concatenate(
                [tbl, np.zeros((self.c_pad - C, tbl.shape[1]), tbl.dtype)], axis=0)
        self.label_table = jnp.asarray(tbl, jnp.int32)     # (c_pad, N)

    def forward(self, x, indices, weight_dict=None):
        B, D0 = x.shape
        B_pad = _round_up(max(B, _SUBLANE_BF16), _SUBLANE_BF16)   # bf16 sublane pack

        x_p = jnp.zeros((B_pad, self.d_pad), jnp.float32)
        x_p = x_p.at[:B, :D0].set(x.astype(jnp.float32)).astype(jnp.bfloat16)
        row_w = jnp.zeros((B_pad, 1), jnp.float32).at[:B, 0].set(1.0 / B)

        labels = self.label_table[:, indices]                     # (c_pad, B) single gather
        labels_p = jnp.zeros((self.c_pad, B_pad, 1), jnp.int32).at[:, :B, 0].set(labels)

        logits_all, losses = _ensemble_forward(
            x_p, self.w1, self.w2, self.w3, self.bias_pack, labels_p, row_w, cb=self.cb)

        loss = jnp.float32(0.0)
        loss_dict = OrderedDict()
        pred_score_dict = OrderedDict()
        for i, n in enumerate(self.names):
            loss_i = losses[i, 0, 0]
            if weight_dict is None:
                loss = loss + loss_i
            elif weight_dict[n] > self.minimum_agreement:
                loss = loss + weight_dict[n] * loss_i
            loss_dict[n] = loss_i
            pred_score_dict[n] = logits_all[i, :B, :self.output_dims[n]]
        return loss, loss_dict, pred_score_dict


if __name__ == "__main__":
    key = jax.random.PRNGKey(0)

    # Small shapes consistent with the module: MLP over flat features.
    B, D0 = 8, 32                 # batch, input feature dim
    hidden_layers = [D0, 32, 64]  # `layers` arg (output dim inferred per classifier)
    N = 64                        # dataset size (length of cluster-label arrays)

    key, kx, ki, kl1, kl2, kens = jax.random.split(key, 6)
    x = jax.random.normal(kx, (B, D0), dtype=jnp.float32)
    indices = jax.random.randint(ki, (B,), 0, N, dtype=jnp.int32)

    # Two clustering results with different numbers of clusters (all ids present
    # and contiguous, matching the assumptions of the reference module).
    kmeans_labels = jax.random.permutation(kl1, jnp.arange(N) % 8).astype(jnp.int32)
    spectral_labels = jax.random.permutation(kl2, jnp.arange(N) % 16).astype(jnp.int32)
    cluster_label_dict = OrderedDict(kmeans=kmeans_labels, spectral=spectral_labels)

    ensemble = ClassifierEnsemblePallas(hidden_layers, cluster_label_dict, kens)

    loss, loss_dict, pred_score_dict = ensemble.forward(x, indices)
    jax.block_until_ready(loss)
    for v in pred_score_dict.values():
        jax.block_until_ready(v)

    print("KERNEL_OK")
</pallas_src>

<mosaic_0001>
module attributes {stable_mosaic.version = 11 : i64} {
  func.func @kernel(%arg0: i32, %arg1: memref<16x128xbf16, #tpu.memory_space<vmem>>, %arg2: memref<2x128x128xbf16, #tpu.memory_space<vmem>>, %arg3: memref<2x128x128xbf16, #tpu.memory_space<vmem>>, %arg4: memref<2x128x128xbf16, #tpu.memory_space<vmem>>, %arg5: memref<2x1x384xf32, #tpu.memory_space<vmem>>, %arg6: memref<2x16x1xi32, #tpu.memory_space<vmem>>, %arg7: memref<16x1xf32, #tpu.memory_space<vmem>>, %arg8: memref<2x16x128xf32, #tpu.memory_space<vmem>>, %arg9: memref<2x1x1xf32, #tpu.memory_space<vmem>>) attributes {dimension_semantics = [#tpu.dimension_semantics<parallel>], iteration_bounds = array<i64: 1>, scalar_prefetch = 0 : i64, scratch_operands = 0 : i64, tpu.core_type = #tpu.core_type<tc>, window_params = [{pipeline_mode = #tpu.pipeline_mode<synchronous>, transform_indices = @transform_0, window_bounds = array<i64: 16, 128>}, {transform_indices = @transform_1, window_bounds = array<i64: 2, 128, 128>}, {transform_indices = @transform_2, window_bounds = array<i64: 2, 128, 128>}, {transform_indices = @transform_3, window_bounds = array<i64: 2, 128, 128>}, {transform_indices = @transform_4, window_bounds = array<i64: 2, 1, 384>}, {transform_indices = @transform_5, window_bounds = array<i64: 2, 16, 1>}, {pipeline_mode = #tpu.pipeline_mode<synchronous>, transform_indices = @transform_6, window_bounds = array<i64: 16, 1>}, {transform_indices = @transform_7, window_bounds = array<i64: 2, 16, 128>}, {transform_indices = @transform_8, window_bounds = array<i64: 2, 1, 1>}]} {
    %c0 = arith.constant 0 : index
    %c0_0 = arith.constant 0 : index
    %0 = vector.load %arg1[%c0, %c0_0] : memref<16x128xbf16, #tpu.memory_space<vmem>>, vector<16x128xbf16>
    %c0_1 = arith.constant 0 : index
    %c0_2 = arith.constant 0 : index
    %1 = vector.load %arg7[%c0_1, %c0_2] : memref<16x1xf32, #tpu.memory_space<vmem>>, vector<16x1xf32>
    %c0_3 = arith.constant 0 : index
    %c0_4 = arith.constant 0 : index
    %c0_5 = arith.constant 0 : index
    %2 = vector.load %arg5[%c0_3, %c0_4, %c0_5] : memref<2x1x384xf32, #tpu.memory_space<vmem>>, vector<2x1x384xf32>
    %3 = vector.extract_strided_slice %2 {offsets = [0, 0, 0], sizes = [1, 1, 128], strides = [1, 1, 1]} : vector<2x1x384xf32> to vector<1x1x128xf32>
    %4 = vector.shape_cast %3 : vector<1x1x128xf32> to vector<1x128xf32>
    %5 = vector.extract_strided_slice %2 {offsets = [0, 0, 128], sizes = [1, 1, 128], strides = [1, 1, 1]} : vector<2x1x384xf32> to vector<1x1x128xf32>
    %6 = vector.shape_cast %5 : vector<1x1x128xf32> to vector<1x128xf32>
    %7 = vector.extract_strided_slice %2 {offsets = [0, 0, 256], sizes = [1, 1, 128], strides = [1, 1, 1]} : vector<2x1x384xf32> to vector<1x1x128xf32>
    %8 = vector.shape_cast %7 : vector<1x1x128xf32> to vector<1x128xf32>
    %c0_6 = arith.constant 0 : index
    %c0_7 = arith.constant 0 : index
    %c0_8 = arith.constant 0 : index
    %9 = vector.load %arg2[%c0_6, %c0_7, %c0_8] : memref<2x128x128xbf16, #tpu.memory_space<vmem>>, vector<1x128x128xbf16>
    %10 = vector.shape_cast %9 : vector<1x128x128xbf16> to vector<128x128xbf16>
    %cst = arith.constant dense<0.000000e+00> : vector<16x128xf32>
    %11 = tpu.matmul %0, %10, %cst {dimension_numbers = #tpu.dot_dimension_numbers<[1], [0], [0], [1], [0, 0, 1, 1], [], []>} : vector<16x128xbf16>, vector<128x128xbf16>, vector<16x128xf32> -> vector<16x128xf32>
    %12 = vector.broadcast %4 : vector<1x128xf32> to vector<16x128xf32>
    %13 = arith.addf %11, %12 : vector<16x128xf32>
    %cst_9 = arith.constant 0.00999999977 : f32
    %14 = vector.broadcast %cst_9 : f32 to vector<16x128xf32>
    %15 = arith.mulf %14, %13 : vector<16x128xf32>
    %16 = arith.maximumf %13, %15 : vector<16x128xf32>
    %17 = arith.truncf %16 : vector<16x128xf32> to vector<16x128xbf16>
    %c0_10 = arith.constant 0 : index
    %c0_11 = arith.constant 0 : index
    %c0_12 = arith.constant 0 : index
    %18 = vector.load %arg3[%c0_10, %c0_11, %c0_12] : memref<2x128x128xbf16, #tpu.memory_space<vmem>>, vector<1x128x128xbf16>
    %19 = vector.shape_cast %18 : vector<1x128x128xbf16> to vector<128x128xbf16>
    %cst_13 = arith.constant dense<0.000000e+00> : vector<16x128xf32>
    %20 = tpu.matmul %17, %19, %cst_13 {dimension_numbers = #tpu.dot_dimension_numbers<[1], [0], [0], [1], [0, 0, 1, 1], [], []>} : vector<16x128xbf16>, vector<128x128xbf16>, vector<16x128xf32> -> vector<16x128xf32>
    %21 = vector.broadcast %6 : vector<1x128xf32> to vector<16x128xf32>
    %22 = arith.addf %20, %21 : vector<16x128xf32>
    %cst_14 = arith.constant 0.00999999977 : f32
    %23 = vector.broadcast %cst_14 : f32 to vector<16x128xf32>
    %24 = arith.mulf %23, %22 : vector<16x128xf32>
    %25 = arith.maximumf %22, %24 : vector<16x128xf32>
    %26 = arith.truncf %25 : vector<16x128xf32> to vector<16x128xbf16>
    %c0_15 = arith.constant 0 : index
    %c0_16 = arith.constant 0 : index
    %c0_17 = arith.constant 0 : index
    %27 = vector.load %arg4[%c0_15, %c0_16, %c0_17] : memref<2x128x128xbf16, #tpu.memory_space<vmem>>, vector<1x128x128xbf16>
    %28 = vector.shape_cast %27 : vector<1x128x128xbf16> to vector<128x128xbf16>
    %cst_18 = arith.constant dense<0.000000e+00> : vector<16x128xf32>
    %29 = tpu.matmul %26, %28, %cst_18 {dimension_numbers = #tpu.dot_dimension_numbers<[1], [0], [0], [1], [0, 0, 1, 1], [], []>} : vector<16x128xbf16>, vector<128x128xbf16>, vector<16x128xf32> -> vector<16x128xf32>
    %30 = vector.broadcast %8 : vector<1x128xf32> to vector<16x128xf32>
    %31 = arith.addf %29, %30 : vector<16x128xf32>
    %c0_19 = arith.constant 0 : index
    %c0_20 = arith.constant 0 : index
    %c0_21 = arith.constant 0 : index
    %32 = vector.load %arg8[%c0_19, %c0_20, %c0_21] : memref<2x16x128xf32, #tpu.memory_space<vmem>>, vector<1x16x128xf32>
    %33 = vector.shape_cast %32 : vector<1x16x128xf32> to vector<16x128xf32>
    %34 = vector.shape_cast %31 : vector<16x128xf32> to vector<1x16x128xf32>
    tpu.vector_store %arg8[%c0_19, %c0_20, %c0_21], %34 {strides = array<i32>} : memref<2x16x128xf32, #tpu.memory_space<vmem>>, vector<1x16x128xf32>,
    %cst_22 = arith.constant dense<0xFF800000> : vector<16xf32>
    %35 = vector.multi_reduction <maximumf>, %31, %cst_22 [1] : vector<16x128xf32> to vector<16xf32>
    %36 = vector.shape_cast %35 : vector<16xf32> to vector<16x1xf32>
    %37 = vector.broadcast %36 : vector<16x1xf32> to vector<16x128xf32>
    %38 = arith.subf %31, %37 : vector<16x128xf32>
    %39 = math.exp %38 : vector<16x128xf32>
    %cst_23 = arith.constant dense<0.000000e+00> : vector<16xf32>
    %40 = vector.multi_reduction <add>, %39, %cst_23 [1] : vector<16x128xf32> to vector<16xf32>
    %41 = vector.shape_cast %40 : vector<16xf32> to vector<16x1xf32>
    %42 = math.log %41 : vector<16x1xf32>
    %43 = arith.addf %36, %42 : vector<16x1xf32>
    %c0_24 = arith.constant 0 : index
    %c0_25 = arith.constant 0 : index
    %c0_26 = arith.constant 0 : index
    %44 = vector.load %arg6[%c0_24, %c0_25, %c0_26] : memref<2x16x1xi32, #tpu.memory_space<vmem>>, vector<1x16x1xi32>
    %45 = vector.shape_cast %44 : vector<1x16x1xi32> to vector<16x1xi32>
    %46 = tpu.iota {dimensions = array<i32: 1>} : vector<16x128xi32>
    %47 = vector.broadcast %45 : vector<16x1xi32> to vector<16x128xi32>
    %48 = arith.cmpi eq, %46, %47 : vector<16x128xi32>
    %49 = arith.extui %48 : vector<16x128xi1> to vector<16x128xi32>
    %50 = arith.sitofp %49 : vector<16x128xi32> to vector<16x128xf32>
    %51 = arith.mulf %50, %31 : vector<16x128xf32>
    %cst_27 = arith.constant dense<0.000000e+00> : vector<16xf32>
    %52 = vector.multi_reduction <add>, %51, %cst_27 [1] : vector<16x128xf32> to vector<16xf32>
    %53 = vector.shape_cast %52 : vector<16xf32> to vector<16x1xf32>
    %54 = arith.subf %43, %53 : vector<16x1xf32>
    %55 = arith.mulf %54, %1 : vector<16x1xf32>
    %cst_28 = arith.constant dense<0.000000e+00> : vector<1xf32>
    %56 = vector.multi_reduction <add>, %55, %cst_28 [0] : vector<16x1xf32> to vector<1xf32>
    %57 = vector.shape_cast %56 : vector<1xf32> to vector<1x1xf32>
    %c0_29 = arith.constant 0 : index
    %c0_30 = arith.constant 0 : index
    %c0_31 = arith.constant 0 : index
    %58 = vector.load %arg9[%c0_29, %c0_30, %c0_31] : memref<2x1x1xf32, #tpu.memory_space<vmem>>, vector<1x1x1xf32>
    %59 = vector.shape_cast %58 : vector<1x1x1xf32> to vector<1x1xf32>
    %60 = vector.shape_cast %57 : vector<1x1xf32> to vector<1x1x1xf32>
    tpu.vector_store %arg9[%c0_29, %c0_30, %c0_31], %60 {strides = array<i32>} : memref<2x1x1xf32, #tpu.memory_space<vmem>>, vector<1x1x1xf32>,
    %61 = vector.extract_strided_slice %2 {offsets = [1, 0, 0], sizes = [1, 1, 128], strides = [1, 1, 1]} : vector<2x1x384xf32> to vector<1x1x128xf32>
    %62 = vector.shape_cast %61 : vector<1x1x128xf32> to vector<1x128xf32>
    %63 = vector.extract_strided_slice %2 {offsets = [1, 0, 128], sizes = [1, 1, 128], strides = [1, 1, 1]} : vector<2x1x384xf32> to vector<1x1x128xf32>
    %64 = vector.shape_cast %63 : vector<1x1x128xf32> to vector<1x128xf32>
    %65 = vector.extract_strided_slice %2 {offsets = [1, 0, 256], sizes = [1, 1, 128], strides = [1, 1, 1]} : vector<2x1x384xf32> to vector<1x1x128xf32>
    %66 = vector.shape_cast %65 : vector<1x1x128xf32> to vector<1x128xf32>
    %c1 = arith.constant 1 : index
    %c0_32 = arith.constant 0 : index
    %c0_33 = arith.constant 0 : index
    %67 = vector.load %arg2[%c1, %c0_32, %c0_33] : memref<2x128x128xbf16, #tpu.memory_space<vmem>>, vector<1x128x128xbf16>
    %68 = vector.shape_cast %67 : vector<1x128x128xbf16> to vector<128x128xbf16>
    %cst_34 = arith.constant dense<0.000000e+00> : vector<16x128xf32>
    %69 = tpu.matmul %0, %68, %cst_34 {dimension_numbers = #tpu.dot_dimension_numbers<[1], [0], [0], [1], [0, 0, 1, 1], [], []>} : vector<16x128xbf16>, vector<128x128xbf16>, vector<16x128xf32> -> vector<16x128xf32>
    %70 = vector.broadcast %62 : vector<1x128xf32> to vector<16x128xf32>
    %71 = arith.addf %69, %70 : vector<16x128xf32>
    %cst_35 = arith.constant 0.00999999977 : f32
    %72 = vector.broadcast %cst_35 : f32 to vector<16x128xf32>
    %73 = arith.mulf %72, %71 : vector<16x128xf32>
    %74 = arith.maximumf %71, %73 : vector<16x128xf32>
    %75 = arith.truncf %74 : vector<16x128xf32> to vector<16x128xbf16>
    %c1_36 = arith.constant 1 : index
    %c0_37 = arith.constant 0 : index
    %c0_38 = arith.constant 0 : index
    %76 = vector.load %arg3[%c1_36, %c0_37, %c0_38] : memref<2x128x128xbf16, #tpu.memory_space<vmem>>, vector<1x128x128xbf16>
    %77 = vector.shape_cast %76 : vector<1x128x128xbf16> to vector<128x128xbf16>
    %cst_39 = arith.constant dense<0.000000e+00> : vector<16x128xf32>
    %78 = tpu.matmul %75, %77, %cst_39 {dimension_numbers = #tpu.dot_dimension_numbers<[1], [0], [0], [1], [0, 0, 1, 1], [], []>} : vector<16x128xbf16>, vector<128x128xbf16>, vector<16x128xf32> -> vector<16x128xf32>
    %79 = vector.broadcast %64 : vector<1x128xf32> to vector<16x128xf32>
    %80 = arith.addf %78, %79 : vector<16x128xf32>
    %cst_40 = arith.constant 0.00999999977 : f32
    %81 = vector.broadcast %cst_40 : f32 to vector<16x128xf32>
    %82 = arith.mulf %81, %80 : vector<16x128xf32>
    %83 = arith.maximumf %80, %82 : vector<16x128xf32>
    %84 = arith.truncf %83 : vector<16x128xf32> to vector<16x128xbf16>
    %c1_41 = arith.constant 1 : index
    %c0_42 = arith.constant 0 : index
    %c0_43 = arith.constant 0 : index
    %85 = vector.load %arg4[%c1_41, %c0_42, %c0_43] : memref<2x128x128xbf16, #tpu.memory_space<vmem>>, vector<1x128x128xbf16>
    %86 = vector.shape_cast %85 : vector<1x128x128xbf16> to vector<128x128xbf16>
    %cst_44 = arith.constant dense<0.000000e+00> : vector<16x128xf32>
    %87 = tpu.matmul %84, %86, %cst_44 {dimension_numbers = #tpu.dot_dimension_numbers<[1], [0], [0], [1], [0, 0, 1, 1], [], []>} : vector<16x128xbf16>, vector<128x128xbf16>, vector<16x128xf32> -> vector<16x128xf32>
    %88 = vector.broadcast %66 : vector<1x128xf32> to vector<16x128xf32>
    %89 = arith.addf %87, %88 : vector<16x128xf32>
    %c1_45 = arith.constant 1 : index
    %c0_46 = arith.constant 0 : index
    %c0_47 = arith.constant 0 : index
    %90 = vector.load %arg8[%c1_45, %c0_46, %c0_47] : memref<2x16x128xf32, #tpu.memory_space<vmem>>, vector<1x16x128xf32>
    %91 = vector.shape_cast %90 : vector<1x16x128xf32> to vector<16x128xf32>
    %92 = vector.shape_cast %89 : vector<16x128xf32> to vector<1x16x128xf32>
    tpu.vector_store %arg8[%c1_45, %c0_46, %c0_47], %92 {strides = array<i32>} : memref<2x16x128xf32, #tpu.memory_space<vmem>>, vector<1x16x128xf32>,
    %cst_48 = arith.constant dense<0xFF800000> : vector<16xf32>
    %93 = vector.multi_reduction <maximumf>, %89, %cst_48 [1] : vector<16x128xf32> to vector<16xf32>
    %94 = vector.shape_cast %93 : vector<16xf32> to vector<16x1xf32>
    %95 = vector.broadcast %94 : vector<16x1xf32> to vector<16x128xf32>
    %96 = arith.subf %89, %95 : vector<16x128xf32>
    %97 = math.exp %96 : vector<16x128xf32>
    %cst_49 = arith.constant dense<0.000000e+00> : vector<16xf32>
    %98 = vector.multi_reduction <add>, %97, %cst_49 [1] : vector<16x128xf32> to vector<16xf32>
    %99 = vector.shape_cast %98 : vector<16xf32> to vector<16x1xf32>
    %100 = math.log %99 : vector<16x1xf32>
    %101 = arith.addf %94, %100 : vector<16x1xf32>
    %c1_50 = arith.constant 1 : index
    %c0_51 = arith.constant 0 : index
    %c0_52 = arith.constant 0 : index
    %102 = vector.load %arg6[%c1_50, %c0_51, %c0_52] : memref<2x16x1xi32, #tpu.memory_space<vmem>>, vector<1x16x1xi32>
    %103 = vector.shape_cast %102 : vector<1x16x1xi32> to vector<16x1xi32>
    %104 = tpu.iota {dimensions = array<i32: 1>} : vector<16x128xi32>
    %105 = vector.broadcast %103 : vector<16x1xi32> to vector<16x128xi32>
    %106 = arith.cmpi eq, %104, %105 : vector<16x128xi32>
    %107 = arith.extui %106 : vector<16x128xi1> to vector<16x128xi32>
    %108 = arith.sitofp %107 : vector<16x128xi32> to vector<16x128xf32>
    %109 = arith.mulf %108, %89 : vector<16x128xf32>
    %cst_53 = arith.constant dense<0.000000e+00> : vector<16xf32>
    %110 = vector.multi_reduction <add>, %109, %cst_53 [1] : vector<16x128xf32> to vector<16xf32>
    %111 = vector.shape_cast %110 : vector<16xf32> to vector<16x1xf32>
    %112 = arith.subf %101, %111 : vector<16x1xf32>
    %113 = arith.mulf %112, %1 : vector<16x1xf32>
    %cst_54 = arith.constant dense<0.000000e+00> : vector<1xf32>
    %114 = vector.multi_reduction <add>, %113, %cst_54 [0] : vector<16x1xf32> to vector<1xf32>
    %115 = vector.shape_cast %114 : vector<1xf32> to vector<1x1xf32>
    %c1_55 = arith.constant 1 : index
    %c0_56 = arith.constant 0 : index
    %c0_57 = arith.constant 0 : index
    %116 = vector.load %arg9[%c1_55, %c0_56, %c0_57] : memref<2x1x1xf32, #tpu.memory_space<vmem>>, vector<1x1x1xf32>
    %117 = vector.shape_cast %116 : vector<1x1x1xf32> to vector<1x1xf32>
    %118 = vector.shape_cast %115 : vector<1x1xf32> to vector<1x1x1xf32>
    tpu.vector_store %arg9[%c1_55, %c0_56, %c0_57], %118 {strides = array<i32>} : memref<2x1x1xf32, #tpu.memory_space<vmem>>, vector<1x1x1xf32>,
    return
  }
  func.func @transform_0(%arg0: i32) -> (i32, i32) {
    %c0_i32 = arith.constant 0 : i32
    %c0_i32_0 = arith.constant 0 : i32
    %c0_i32_1 = arith.constant 0 : i32
    return %c0_i32, %c0_i32_0 : i32, i32
  }
  func.func @transform_1(%arg0: i32) -> (i32, i32, i32) {
    %c0_i32 = arith.constant 0 : i32
    %c0_i32_0 = arith.constant 0 : i32
    %c0_i32_1 = arith.constant 0 : i32
    return %arg0, %c0_i32, %c0_i32_0 : i32, i32, i32
  }
  func.func @transform_2(%arg0: i32) -> (i32, i32, i32) {
    %c0_i32 = arith.constant 0 : i32
    %c0_i32_0 = arith.constant 0 : i32
    %c0_i32_1 = arith.constant 0 : i32
    return %arg0, %c0_i32, %c0_i32_0 : i32, i32, i32
  }
  func.func @transform_3(%arg0: i32) -> (i32, i32, i32) {
    %c0_i32 = arith.constant 0 : i32
    %c0_i32_0 = arith.constant 0 : i32
    %c0_i32_1 = arith.constant 0 : i32
    return %arg0, %c0_i32, %c0_i32_0 : i32, i32, i32
  }
  func.func @transform_4(%arg0: i32) -> (i32, i32, i32) {
    %c0_i32 = arith.constant 0 : i32
    %c0_i32_0 = arith.constant 0 : i32
    %c0_i32_1 = arith.constant 0 : i32
    return %arg0, %c0_i32, %c0_i32_0 : i32, i32, i32
  }
  func.func @transform_5(%arg0: i32) -> (i32, i32, i32) {
    %c0_i32 = arith.constant 0 : i32
    %c0_i32_0 = arith.constant 0 : i32
    %c0_i32_1 = arith.constant 0 : i32
    return %arg0, %c0_i32, %c0_i32_0 : i32, i32, i32
  }
  func.func @transform_6(%arg0: i32) -> (i32, i32) {
    %c0_i32 = arith.constant 0 : i32
    %c0_i32_0 = arith.constant 0 : i32
    %c0_i32_1 = arith.constant 0 : i32
    return %c0_i32, %c0_i32_0 : i32, i32
  }
  func.func @transform_7(%arg0: i32) -> (i32, i32, i32) {
    %c0_i32 = arith.constant 0 : i32
    %c0_i32_0 = arith.constant 0 : i32
    %c0_i32_1 = arith.constant 0 : i32
    return %arg0, %c0_i32, %c0_i32_0 : i32, i32, i32
  }
  func.func @transform_8(%arg0: i32) -> (i32, i32, i32) {
    %c0_i32 = arith.constant 0 : i32
    %c0_i32_0 = arith.constant 0 : i32
    %c0_i32_1 = arith.constant 0 : i32
    return %arg0, %c0_i32, %c0_i32_0 : i32, i32, i32
  }
}

</mosaic_0001>

<llo_original>
// kernel: _ensemble_forward.1
$region0: #{_ensemble_forward.1}
  #allocation0 [shape = 'u32[]', space=smem, size = 0x4, offset = 0x4, fixed_abs, tag = 'smem constant byte address 0x4 - core index']
  #allocation1 [shape = 'u32[144,128]{1,0:T(1,128)}', space=vmem, size = 0x12000, scoped, tag = 'internal scratch']
  %s0 = inlined_call_operand.vmem [shape: bf16[16,128], index: 0, kind: input, shape index: {}]
  %s1 = inlined_call_operand.hbm [shape: bf16[2,128,128], index: 1, kind: input, shape index: {}]
  %s2 = inlined_call_operand.hbm [shape: bf16[2,128,128], index: 2, kind: input, shape index: {}]
  %s3 = inlined_call_operand.hbm [shape: bf16[2,128,128], index: 3, kind: input, shape index: {}]
  %s4 = inlined_call_operand.vmem [shape: f32[2,1,384], index: 4, kind: input, shape index: {}]
  %s5 = inlined_call_operand.vmem [shape: s32[2,16,1], index: 5, kind: input, shape index: {}]
  %s6 = inlined_call_operand.vmem [shape: f32[16,1], index: 6, kind: input, shape index: {}]
  %s7 = inlined_call_operand.hbm [shape: f32[2,16,128], index: 7, kind: output, shape index: {0}]
  %s8 = inlined_call_operand.vmem [shape: f32[2,1,1], index: 8, kind: output, shape index: {1}]
  %9 = xla_tuple %s7, %s8
  %s10 = sld [smem:[#allocation0]]
  $region58: #{_ensemble_forward.1} parent=0
    _
  %s12 = ssub.s32 1, %s10
  %s13 = scalar_select 0, %s12, %s10
  $region1: #{_ensemble_forward.1} parent=0
    #allocation2 [shape = 'u8[65536]{0}', space=vmem, size = 0x10000, scoped, tag = 'input window, operand 1, single buffered']
    #allocation3 [shape = 's32[1]{0}', space=sflag, size = 0x4, scoped, tag = 'scoped memory for _ensemble_forward.1']
    #allocation4 [shape = 's32[1]{0}', space=sflag, size = 0x4, scoped, tag = 'scoped memory for _ensemble_forward.1']
    #allocation5 [shape = 'u8[65536]{0}', space=vmem, size = 0x10000, scoped, tag = 'input window, operand 2, single buffered']
    #allocation6 [shape = 's32[1]{0}', space=sflag, size = 0x4, scoped, tag = 'scoped memory for _ensemble_forward.1']
    #allocation7 [shape = 'u8[65536]{0}', space=vmem, size = 0x10000, scoped, tag = 'input window, operand 3, single buffered']
    #allocation8 [shape = 'u8[16384]{0}', space=vmem, size = 0x4000, scoped, tag = 'output window, operand 0, single buffered']
    %14 = vsyncpa [#allocation3], 0
    %15 = vsyncpa [#allocation6], 0
    %16 = vsyncpa [#allocation4], 0
    // Predicated region
    $region2: #{_ensemble_forward.1} parent=1 // pred_check
      _
    $region3: #{_ensemble_forward.1} parent=1 // pred_check_branch
      %18 = sbr.rel (0) target = $region5
    $region4: #{_ensemble_forward.1} parent=1 // pred_region
      _
    $region5: #{_ensemble_forward.1} parent=1 // pred_fallthru
      _
    // Predicated region
    $region6: #{_ensemble_forward.1} parent=1 // pred_check
      _
    $region7: #{_ensemble_forward.1} parent=1 // pred_check_branch
      %20 = sbr.rel (0) target = $region9
    $region8: #{_ensemble_forward.1} parent=1 // pred_region
      %s22 = ssub.s32 2048, 2048
      %23 = vsyncadd [#allocation3], %s22
      %s24 = sshll.u32 [#allocation2], 4
      %s25 = int_to_ptr.vmem [resolvable:$true] %s24
      %30 = dma.hbm_to_vmem [thread:$0]  %s1, 2048, %s25, [#allocation3], 64, 64, 4
    $region9: #{_ensemble_forward.1} parent=1 // pred_fallthru
      _
    // Predicated region
    $region10: #{_ensemble_forward.1} parent=1 // pred_check
      _
    $region11: #{_ensemble_forward.1} parent=1 // pred_check_branch
      %32 = sbr.rel (0) target = $region13
    $region12: #{_ensemble_forward.1} parent=1 // pred_region
      %s34 = ssub.s32 2048, 2048
      %35 = vsyncadd [#allocation6], %s34
      %s36 = sshll.u32 [#allocation5], 4
      %s37 = int_to_ptr.vmem [resolvable:$true] %s36
      %42 = dma.hbm_to_vmem [thread:$0]  %s2, 2048, %s37, [#allocation6], 64, 64, 4
    $region13: #{_ensemble_forward.1} parent=1 // pred_fallthru
      _
    // Predicated region
    $region14: #{_ensemble_forward.1} parent=1 // pred_check
      _
    $region15: #{_ensemble_forward.1} parent=1 // pred_check_branch
      %44 = sbr.rel (0) target = $region17
    $region16: #{_ensemble_forward.1} parent=1 // pred_region
      %s46 = ssub.s32 2048, 2048
      %47 = vsyncadd [#allocation6], %s46
      %s48 = sshll.u32 [#allocation7], 4
      %s49 = int_to_ptr.vmem [resolvable:$true] %s48
      %54 = dma.hbm_to_vmem [thread:$0]  %s3, 2048, %s49, [#allocation6], 64, 64, 4
    $region17: #{_ensemble_forward.1} parent=1 // pred_fallthru
      _
    // Predicated region
    $region18: #{_ensemble_forward.1} parent=1 // pred_check
      _
    $region19: #{_ensemble_forward.1} parent=1 // pred_check_branch
      %56 = sbr.rel (0) target = $region21
    $region20: #{_ensemble_forward.1} parent=1 // pred_region
      _
    $region21: #{_ensemble_forward.1} parent=1 // pred_fallthru
      _
    // Predicated region
    $region22: #{_ensemble_forward.1} parent=1 // pred_check
      _
    $region23: #{_ensemble_forward.1} parent=1 // pred_check_branch
      %58 = sbr.rel (0) target = $region25
    $region24: #{_ensemble_forward.1} parent=1 // pred_region
      _
    $region25: #{_ensemble_forward.1} parent=1 // pred_fallthru
      _
    // Predicated region
    $region26: #{_ensemble_forward.1} parent=1 // pred_check
      _
    $region27: #{_ensemble_forward.1} parent=1 // pred_check_branch
      %60 = sbr.rel (0) target = $region29
    $region28: #{_ensemble_forward.1} parent=1 // pred_region
      _
    $region29: #{_ensemble_forward.1} parent=1 // pred_fallthru
      _
    // Predicated region
    $region30: #{_ensemble_forward.1} parent=1 // pred_check
      _
    $region31: #{_ensemble_forward.1} parent=1 // pred_check_branch
      %62 = sbr.rel (0) target = $region33
    $region32: #{_ensemble_forward.1} parent=1 // pred_region
      %63 = dma.done [#allocation3], 2048
    $region33: #{_ensemble_forward.1} parent=1 // pred_fallthru
      _
    // Predicated region
    $region34: #{_ensemble_forward.1} parent=1 // pred_check
      _
    $region35: #{_ensemble_forward.1} parent=1 // pred_check_branch
      %65 = sbr.rel (0) target = $region37
    $region36: #{_ensemble_forward.1} parent=1 // pred_region
      %66 = dma.done [#allocation6], 2048
    $region37: #{_ensemble_forward.1} parent=1 // pred_fallthru
      _
    // Predicated region
    $region38: #{_ensemble_forward.1} parent=1 // pred_check
      _
    $region39: #{_ensemble_forward.1} parent=1 // pred_check_branch
      %68 = sbr.rel (0) target = $region41
    $region40: #{_ensemble_forward.1} parent=1 // pred_region
      %69 = dma.done [#allocation6], 2048
    $region41: #{_ensemble_forward.1} parent=1 // pred_fallthru
      _
    %v71 = vld [vmem:[%s0] sm:$0xf]
    %v72 = vld [vmem:[%s0 + $0x4] sm:$0xf]
    %v73 = vld [vmem:[%s6] sm:$0xff]
    %v74 = vld [vmem:[%s6 + $0x8] sm:$0xff]
    %v75 = vld [vmem:[%s4] sm:$0x7]
    %v76 = vld [vmem:[%s4 + $0x3] sm:$0x7]
    %v78 = vrot.slane %v75, 1
    %v79 = vrot.slane %v75, 2
    %v80 = vld [vmem:[#allocation2] sm:$0xf]
    %v81 = vld [vmem:[#allocation2 + $0x4] sm:$0xf]
    %v82 = vld [vmem:[#allocation2 + $0x8] sm:$0xf]
    %v83 = vld [vmem:[#allocation2 + $0xc] sm:$0xf]
    %v84 = vld [vmem:[#allocation2 + $0x10] sm:$0xf]
    %v85 = vld [vmem:[#allocation2 + $0x14] sm:$0xf]
    %v86 = vld [vmem:[#allocation2 + $0x18] sm:$0xf]
    %v87 = vld [vmem:[#allocation2 + $0x1c] sm:$0xf]
    %v88 = vld [vmem:[#allocation2 + $0x20] sm:$0xf]
    %v89 = vld [vmem:[#allocation2 + $0x24] sm:$0xf]
    %v90 = vld [vmem:[#allocation2 + $0x28] sm:$0xf]
    %v91 = vld [vmem:[#allocation2 + $0x2c] sm:$0xf]
    %v92 = vld [vmem:[#allocation2 + $0x30] sm:$0xf]
    %v93 = vld [vmem:[#allocation2 + $0x34] sm:$0xf]
    %v94 = vld [vmem:[#allocation2 + $0x38] sm:$0xf]
    %v95 = vld [vmem:[#allocation2 + $0x3c] sm:$0xf]
    %v96 = vlaneseq
    %v97 = vshrl.u32 %v96, 7
    %v98 = vsub.s32 0, %v97
    %v99 = vrot.slane %v75, %v98
    %v103 = vunpack.c.l.b16 %v71
    %v104 = vunpack.c.l.b16 %v72
    %v105 = vpack.c.b16 %v104, %v103
    %v123 = vunpack.c.l.b16 %v80
    %v124 = vunpack.c.l.b16 %v81
    %v125 = vunpack.c.l.b16 %v82
    %v126 = vunpack.c.l.b16 %v83
    %v127 = vunpack.c.l.b16 %v84
    %v128 = vunpack.c.l.b16 %v85
    %v129 = vunpack.c.l.b16 %v86
    %v130 = vunpack.c.l.b16 %v87
    %v131 = vunpack.c.l.b16 %v88
    %v132 = vunpack.c.l.b16 %v89
    %v133 = vunpack.c.l.b16 %v90
    %v134 = vunpack.c.l.b16 %v91
    %v135 = vunpack.c.l.b16 %v92
    %v136 = vunpack.c.l.b16 %v93
    %v137 = vunpack.c.l.b16 %v94
    %v138 = vunpack.c.l.b16 %v95
    %v139 = vpack.c.b16 %v124, %v123
    %v140 = vpack.c.b16 %v126, %v125
    %v141 = vpack.c.b16 %v128, %v127
    %v142 = vpack.c.b16 %v130, %v129
    %v143 = vpack.c.b16 %v132, %v131
    %v144 = vpack.c.b16 %v134, %v133
    %v145 = vpack.c.b16 %v136, %v135
    %v146 = vpack.c.b16 %v138, %v137
    %155 = vmatprep.subr.bf16.mxu0 0
    %156 = vmatpush1.bf16.msra.mxu0 %v139
    %157 = vmatprep.subr.bf16.mxu0 0
    %158 = vmatpush1.bf16.msra.mxu0 %v140
    %159 = vmatprep.subr.bf16.mxu0 0
    %160 = vmatpush1.bf16.msra.mxu0 %v141
    %161 = vmatprep.subr.bf16.mxu0 0
    %162 = vmatpush1.bf16.msra.mxu0 %v142
    %163 = vmatprep.subr.bf16.mxu0 0
    %164 = vmatpush1.bf16.msra.mxu0 %v143
    %165 = vmatprep.subr.bf16.mxu0 0
    %166 = vmatpush1.bf16.msra.mxu0 %v144
    %167 = vmatprep.subr.bf16.mxu0 0
    %168 = vmatpush1.bf16.msra.mxu0 %v145
    %169 = vmatprep.subr.bf16.mxu0 0
    %170 = vmatpush1.bf16.msra.mxu0 %v146
    %171 = vmatprep.subr.bf16.mxu0 0
    %172 = vmatpush1.bf16.msra.mxu0 0
    %173 = vmatprep.subr.bf16.mxu0 0
    %174 = vmatpush1.bf16.msra.mxu0 0
    %175 = vmatprep.subr.bf16.mxu0 0
    %176 = vmatpush1.bf16.msra.mxu0 0
    %177 = vmatprep.subr.bf16.mxu0 0
    %178 = vmatpush1.bf16.msra.mxu0 0
    %179 = vmatprep.subr.bf16.mxu0 0
    %180 = vmatpush1.bf16.msra.mxu0 0
    %181 = vmatprep.subr.bf16.mxu0 0
    %182 = vmatpush1.bf16.msra.mxu0 0
    %183 = vmatprep.subr.bf16.mxu0 0
    %184 = vmatpush1.bf16.msra.mxu0 0
    %185 = vmatprep.subr.bf16.mxu0 0
    %186 = vmatpush1.bf16.msra.mxu0 0
    %187 = vmatprep.mubr.bf16.mxu0 0
    %188 = vmatmul.mubr.bf16.gmra.mrb[0].mxu0 %v105
    %v189 = vpop.f32.mrb[0].mxu0
    %v190 = vadd.f32 %v99, %v189
    %v191 = vpop.f32.mrb[0].mxu0
    %v192 = vpop.f32.mrb[0].mxu0
    %v193 = vadd.f32 %v99, %v192
    %v194 = vpop.f32.mrb[0].mxu0
    %195 = vdwg.mxu0
    %v196 = vmul.f32 %v190, 0.01
    %v197 = vmul.f32 %v193, 0.01
    %v198 = vmax.f32 %v190, %v196
    %v199 = vmax.f32 %v193, %v197
    %v200 = vpack.c.bf16 %v199, %v198
    %v201 = vld [vmem:[#allocation5] sm:$0xf]
    %v202 = vld [vmem:[#allocation5 + $0x4] sm:$0xf]
    %v203 = vld [vmem:[#allocation5 + $0x8] sm:$0xf]
    %v204 = vld [vmem:[#allocation5 + $0xc] sm:$0xf]
    %v205 = vld [vmem:[#allocation5 + $0x10] sm:$0xf]
    %v206 = vld [vmem:[#allocation5 + $0x14] sm:$0xf]
    %v207 = vld [vmem:[#allocation5 + $0x18] sm:$0xf]
    %v208 = vld [vmem:[#allocation5 + $0x1c] sm:$0xf]
    %v209 = vld [vmem:[#allocation5 + $0x20] sm:$0xf]
    %v210 = vld [vmem:[#allocation5 + $0x24] sm:$0xf]
    %v211 = vld [vmem:[#allocation5 + $0x28] sm:$0xf]
    %v212 = vld [vmem:[#allocation5 + $0x2c] sm:$0xf]
    %v213 = vld [vmem:[#allocation5 + $0x30] sm:$0xf]
    %v214 = vld [vmem:[#allocation5 + $0x34] sm:$0xf]
    %v215 = vld [vmem:[#allocation5 + $0x38] sm:$0xf]
    %v216 = vld [vmem:[#allocation5 + $0x3c] sm:$0xf]
    %v217 = vlaneseq
    %v218 = vshrl.u32 %v217, 7
    %v219 = vsub.s32 0, %v218
    %v220 = vrot.slane %v78, %v219
    %v238 = vunpack.c.l.b16 %v201
    %v239 = vunpack.c.l.b16 %v202
    %v240 = vunpack.c.l.b16 %v203
    %v241 = vunpack.c.l.b16 %v204
    %v242 = vunpack.c.l.b16 %v205
    %v243 = vunpack.c.l.b16 %v206
    %v244 = vunpack.c.l.b16 %v207
    %v245 = vunpack.c.l.b16 %v208
    %v246 = vunpack.c.l.b16 %v209
    %v247 = vunpack.c.l.b16 %v210
    %v248 = vunpack.c.l.b16 %v211
    %v249 = vunpack.c.l.b16 %v212
    %v250 = vunpack.c.l.b16 %v213
    %v251 = vunpack.c.l.b16 %v214
    %v252 = vunpack.c.l.b16 %v215
    %v253 = vunpack.c.l.b16 %v216
    %v254 = vpack.c.b16 %v239, %v238
    %v255 = vpack.c.b16 %v241, %v240
    %v256 = vpack.c.b16 %v243, %v242
    %v257 = vpack.c.b16 %v245, %v244
    %v258 = vpack.c.b16 %v247, %v246
    %v259 = vpack.c.b16 %v249, %v248
    %v260 = vpack.c.b16 %v251, %v250
    %v261 = vpack.c.b16 %v253, %v252
    %270 = vmatprep.subr.bf16.mxu0 0
    %271 = vmatpush1.bf16.msra.mxu0 %v254
    %272 = vmatprep.subr.bf16.mxu0 0
    %273 = vmatpush1.bf16.msra.mxu0 %v255
    %274 = vmatprep.subr.bf16.mxu0 0
    %275 = vmatpush1.bf16.msra.mxu0 %v256
    %276 = vmatprep.subr.bf16.mxu0 0
    %277 = vmatpush1.bf16.msra.mxu0 %v257
    %278 = vmatprep.subr.bf16.mxu0 0
    %279 = vmatpush1.bf16.msra.mxu0 %v258
    %280 = vmatprep.subr.bf16.mxu0 0
    %281 = vmatpush1.bf16.msra.mxu0 %v259
    %282 = vmatprep.subr.bf16.mxu0 0
    %283 = vmatpush1.bf16.msra.mxu0 %v260
    %284 = vmatprep.subr.bf16.mxu0 0
    %285 = vmatpush1.bf16.msra.mxu0 %v261
    %286 = vmatprep.subr.bf16.mxu0 0
    %287 = vmatpush1.bf16.msra.mxu0 0
    %288 = vmatprep.subr.bf16.mxu0 0
    %289 = vmatpush1.bf16.msra.mxu0 0
    %290 = vmatprep.subr.bf16.mxu0 0
    %291 = vmatpush1.bf16.msra.mxu0 0
    %292 = vmatprep.subr.bf16.mxu0 0
    %293 = vmatpush1.bf16.msra.mxu0 0
    %294 = vmatprep.subr.bf16.mxu0 0
    %295 = vmatpush1.bf16.msra.mxu0 0
    %296 = vmatprep.subr.bf16.mxu0 0
    %297 = vmatpush1.bf16.msra.mxu0 0
    %298 = vmatprep.subr.bf16.mxu0 0
    %299 = vmatpush1.bf16.msra.mxu0 0
    %300 = vmatprep.subr.bf16.mxu0 0
    %301 = vmatpush1.bf16.msra.mxu0 0
    %302 = vmatprep.mubr.bf16.mxu0 0
    %303 = vmatmul.mubr.bf16.gmra.mrb[0].mxu0 %v200
    %v304 = vpop.f32.mrb[0].mxu0
    %v305 = vadd.f32 %v220, %v304
    %v306 = vpop.f32.mrb[0].mxu0
    %v307 = vpop.f32.mrb[0].mxu0
    %v308 = vadd.f32 %v220, %v307
    %v309 = vpop.f32.mrb[0].mxu0
    %310 = vdwg.mxu0
    %v311 = vmul.f32 %v305, 0.01
    %v312 = vmul.f32 %v308, 0.01
    %v313 = vmax.f32 %v305, %v311
    %v314 = vmax.f32 %v308, %v312
    %v315 = vpack.c.bf16 %v314, %v313
    %v316 = vld [vmem:[#allocation7] sm:$0xf]
    %v317 = vld [vmem:[#allocation7 + $0x4] sm:$0xf]
    %v318 = vld [vmem:[#allocation7 + $0x8] sm:$0xf]
    %v319 = vld [vmem:[#allocation7 + $0xc] sm:$0xf]
    %v320 = vld [vmem:[#allocation7 + $0x10] sm:$0xf]
    %v321 = vld [vmem:[#allocation7 + $0x14] sm:$0xf]
    %v322 = vld [vmem:[#allocation7 + $0x18] sm:$0xf]
    %v323 = vld [vmem:[#allocation7 + $0x1c] sm:$0xf]
    %v324 = vld [vmem:[#allocation7 + $0x20] sm:$0xf]
    %v325 = vld [vmem:[#allocation7 + $0x24] sm:$0xf]
    %v326 = vld [vmem:[#allocation7 + $0x28] sm:$0xf]
    %v327 = vld [vmem:[#allocation7 + $0x2c] sm:$0xf]
    %v328 = vld [vmem:[#allocation7 + $0x30] sm:$0xf]
    %v329 = vld [vmem:[#allocation7 + $0x34] sm:$0xf]
    %v330 = vld [vmem:[#allocation7 + $0x38] sm:$0xf]
    %v331 = vld [vmem:[#allocation7 + $0x3c] sm:$0xf]
    %v332 = vlaneseq
    %v333 = vshrl.u32 %v332, 7
    %v334 = vsub.s32 0, %v333
    %v335 = vrot.slane %v79, %v334
    %v353 = vunpack.c.l.b16 %v316
    %v354 = vunpack.c.l.b16 %v317
    %v355 = vunpack.c.l.b16 %v318
    %v356 = vunpack.c.l.b16 %v319
    %v357 = vunpack.c.l.b16 %v320
    %v358 = vunpack.c.l.b16 %v321
    %v359 = vunpack.c.l.b16 %v322
    %v360 = vunpack.c.l.b16 %v323
    %v361 = vunpack.c.l.b16 %v324
    %v362 = vunpack.c.l.b16 %v325
    %v363 = vunpack.c.l.b16 %v326
    %v364 = vunpack.c.l.b16 %v327
    %v365 = vunpack.c.l.b16 %v328
    %v366 = vunpack.c.l.b16 %v329
    %v367 = vunpack.c.l.b16 %v330
    %v368 = vunpack.c.l.b16 %v331
    %v369 = vpack.c.b16 %v354, %v353
    %v370 = vpack.c.b16 %v356, %v355
    %v371 = vpack.c.b16 %v358, %v357
    %v372 = vpack.c.b16 %v360, %v359
    %v373 = vpack.c.b16 %v362, %v361
    %v374 = vpack.c.b16 %v364, %v363
    %v375 = vpack.c.b16 %v366, %v365
    %v376 = vpack.c.b16 %v368, %v367
    %385 = vmatprep.subr.bf16.mxu0 0
    %386 = vmatpush1.bf16.msra.mxu0 %v369
    %387 = vmatprep.subr.bf16.mxu0 0
    %388 = vmatpush1.bf16.msra.mxu0 %v370
    %389 = vmatprep.subr.bf16.mxu0 0
    %390 = vmatpush1.bf16.msra.mxu0 %v371
    %391 = vmatprep.subr.bf16.mxu0 0
    %392 = vmatpush1.bf16.msra.mxu0 %v372
    %393 = vmatprep.subr.bf16.mxu0 0
    %394 = vmatpush1.bf16.msra.mxu0 %v373
    %395 = vmatprep.subr.bf16.mxu0 0
    %396 = vmatpush1.bf16.msra.mxu0 %v374
    %397 = vmatprep.subr.bf16.mxu0 0
    %398 = vmatpush1.bf16.msra.mxu0 %v375
    %399 = vmatprep.subr.bf16.mxu0 0
    %400 = vmatpush1.bf16.msra.mxu0 %v376
    %401 = vmatprep.subr.bf16.mxu0 0
    %402 = vmatpush1.bf16.msra.mxu0 0
    %403 = vmatprep.subr.bf16.mxu0 0
    %404 = vmatpush1.bf16.msra.mxu0 0
    %405 = vmatprep.subr.bf16.mxu0 0
    %406 = vmatpush1.bf16.msra.mxu0 0
    %407 = vmatprep.subr.bf16.mxu0 0
    %408 = vmatpush1.bf16.msra.mxu0 0
    %409 = vmatprep.subr.bf16.mxu0 0
    %410 = vmatpush1.bf16.msra.mxu0 0
    %411 = vmatprep.subr.bf16.mxu0 0
    %412 = vmatpush1.bf16.msra.mxu0 0
    %413 = vmatprep.subr.bf16.mxu0 0
    %414 = vmatpush1.bf16.msra.mxu0 0
    %415 = vmatprep.subr.bf16.mxu0 0
    %416 = vmatpush1.bf16.msra.mxu0 0
    %417 = vmatprep.mubr.bf16.mxu0 0
    %418 = vmatmul.mubr.bf16.gmra.mrb[0].mxu0 %v315
    %v419 = vpop.f32.mrb[0].mxu0
    %v420 = vadd.f32 %v335, %v419
    %v421 = vpop.f32.mrb[0].mxu0
    %v422 = vpop.f32.mrb[0].mxu0
    %v423 = vadd.f32 %v335, %v422
    %v424 = vpop.f32.mrb[0].mxu0
    %425 = vdwg.mxu0
    %426 = vst [vmem:[#allocation8] sm:$0xff] %v420
    %427 = vst [vmem:[#allocation8 + $0x8] sm:$0xff] %v423
    %428 = vmax.xlane.f32.xlu0 %v420
    %v429 = vpop.xlane.xlu0 %428
    %430 = vmax.xlane.f32.xlu0 %v423
    %v431 = vpop.xlane.xlu0 %430
    %v432 = vsub.f32 %v420, %v429
    %v433 = vsub.f32 %v423, %v431
    %v434 = vmul.f32 %v432, 1.442695
    %v435 = vpow.pop %v434
    %v436 = vmul.f32 %v433, 1.442695
    %v437 = vpow.pop %v436
    %438 = vadd.xlane.f32.xlu0 %v435
    %v439 = vpop.xlane.xlu0 %438
    %440 = vadd.xlane.f32.xlu0 %v437
    %v441 = vpop.xlane.xlu0 %440
    %v442 = vlog2.pop %v439
    %v443 = vmul.f32 %v442, 0.6931472
    %v444 = vlog2.pop %v441
    %v445 = vmul.f32 %v444, 0.6931472
    %v446 = vadd.f32 %v429, %v443
    %v447 = vadd.f32 %v431, %v445
    %v448 = vld [vmem:[%s5] sm:$0xff]
    %v449 = vld [vmem:[%s5 + $0x8] sm:$0xff]
    %v450 = vlaneseq
    %v451 = vand.u32 %v450, 127
    %452 = vset.pattern.permute.xlu0 0
    %453 = vperm.xlu0 %452, %v448
    %v454 = vpop.permute.xlu0 %453
    %455 = vset.pattern.permute.xlu0 0
    %456 = vperm.xlu0 %455, %v449
    %v457 = vpop.permute.xlu0 %456
    %vm458 = vcmp.eq.s32.totalorder %v451, %v454
    %vm459 = vcmp.eq.s32.totalorder %v451, %v457
    %v460 = vsel %vm458, 1, 0
    %v461 = vsel %vm459, 1, 0
    %v462 = vcvt.s32.f32 %v460
    %v463 = vcvt.s32.f32 %v461
    %v464 = vmul.f32 %v462, %v420
    %v465 = vmul.f32 %v463, %v423
    %466 = vadd.xlane.f32.xlu0 %v464
    %v467 = vpop.xlane.xlu0 %466
    %468 = vadd.xlane.f32.xlu0 %v465
    %v469 = vpop.xlane.xlu0 %468
    %v470 = vsub.f32 %v446, %v467
    %v471 = vsub.f32 %v447, %v469
    %v472 = vmul.f32 %v470, %v73
    %v473 = vmul.f32 %v471, %v74
    %vm474 = vcmask 7168
    %v475 = vsel %vm474, %v472, 0.0
    %v476 = vsel %vm474, %v473, 0.0
    %v477 = vadd.f32 %v475, %v476
    %v478 = vrot.slane %v477, 4
    %v479 = vadd.f32 %v477, %v478
    %v480 = vrot.slane %v479, 2
    %v481 = vadd.f32 %v479, %v480
    %v482 = vrot.slane %v481, 1
    %v483 = vadd.f32 %v481, %v482
    %vm484 = vcmask 0
    %485 = vst.msk [vmem:[%s8] sm:$0x1] %vm484, %v483
    %v487 = vrot.slane %v76, 1
    %v488 = vrot.slane %v76, 2
    %s489 = scalar_lea.vmem [#allocation2], 64
    %v490 = vld [vmem:[%s489] sm:$0xf]
    %v491 = vld [vmem:[%s489 + $0x4] sm:$0xf]
    %v492 = vld [vmem:[%s489 + $0x8] sm:$0xf]
    %v493 = vld [vmem:[%s489 + $0xc] sm:$0xf]
    %v494 = vld [vmem:[%s489 + $0x10] sm:$0xf]
    %v495 = vld [vmem:[%s489 + $0x14] sm:$0xf]
    %v496 = vld [vmem:[%s489 + $0x18] sm:$0xf]
    %v497 = vld [vmem:[%s489 + $0x1c] sm:$0xf]
    %v498 = vld [vmem:[%s489 + $0x20] sm:$0xf]
    %v499 = vld [vmem:[%s489 + $0x24] sm:$0xf]
    %v500 = vld [vmem:[%s489 + $0x28] sm:$0xf]
    %v501 = vld [vmem:[%s489 + $0x2c] sm:$0xf]
    %v502 = vld [vmem:[%s489 + $0x30] sm:$0xf]
    %v503 = vld [vmem:[%s489 + $0x34] sm:$0xf]
    %v504 = vld [vmem:[%s489 + $0x38] sm:$0xf]
    %v505 = vld [vmem:[%s489 + $0x3c] sm:$0xf]
    %v506 = vlaneseq
    %v507 = vshrl.u32 %v506, 7
    %v508 = vsub.s32 0, %v507
    %v509 = vrot.slane %v76, %v508
    %v527 = vunpack.c.l.b16 %v490
    %v528 = vunpack.c.l.b16 %v491
    %v529 = vunpack.c.l.b16 %v492
    %v530 = vunpack.c.l.b16 %v493
    %v531 = vunpack.c.l.b16 %v494
    %v532 = vunpack.c.l.b16 %v495
    %v533 = vunpack.c.l.b16 %v496
    %v534 = vunpack.c.l.b16 %v497
    %v535 = vunpack.c.l.b16 %v498
    %v536 = vunpack.c.l.b16 %v499
    %v537 = vunpack.c.l.b16 %v500
    %v538 = vunpack.c.l.b16 %v501
    %v539 = vunpack.c.l.b16 %v502
    %v540 = vunpack.c.l.b16 %v503
    %v541 = vunpack.c.l.b16 %v504
    %v542 = vunpack.c.l.b16 %v505
    %v543 = vpack.c.b16 %v528, %v527
    %v544 = vpack.c.b16 %v530, %v529
    %v545 = vpack.c.b16 %v532, %v531
    %v546 = vpack.c.b16 %v534, %v533
    %v547 = vpack.c.b16 %v536, %v535
    %v548 = vpack.c.b16 %v538, %v537
    %v549 = vpack.c.b16 %v540, %v539
    %v550 = vpack.c.b16 %v542, %v541
    %559 = vmatprep.subr.bf16.mxu0 0
    %560 = vmatpush1.bf16.msra.mxu0 %v543
    %561 = vmatprep.subr.bf16.mxu0 0
    %562 = vmatpush1.bf16.msra.mxu0 %v544
    %563 = vmatprep.subr.bf16.mxu0 0
    %564 = vmatpush1.bf16.msra.mxu0 %v545
    %565 = vmatprep.subr.bf16.mxu0 0
    %566 = vmatpush1.bf16.msra.mxu0 %v546
    %567 = vmatprep.subr.bf16.mxu0 0
    %568 = vmatpush1.bf16.msra.mxu0 %v547
    %569 = vmatprep.subr.bf16.mxu0 0
    %570 = vmatpush1.bf16.msra.mxu0 %v548
    %571 = vmatprep.subr.bf16.mxu0 0
    %572 = vmatpush1.bf16.msra.mxu0 %v549
    %573 = vmatprep.subr.bf16.mxu0 0
    %574 = vmatpush1.bf16.msra.mxu0 %v550
    %575 = vmatprep.subr.bf16.mxu0 0
    %576 = vmatpush1.bf16.msra.mxu0 0
    %577 = vmatprep.subr.bf16.mxu0 0
    %578 = vmatpush1.bf16.msra.mxu0 0
    %579 = vmatprep.subr.bf16.mxu0 0
    %580 = vmatpush1.bf16.msra.mxu0 0
    %581 = vmatprep.subr.bf16.mxu0 0
    %582 = vmatpush1.bf16.msra.mxu0 0
    %583 = vmatprep.subr.bf16.mxu0 0
    %584 = vmatpush1.bf16.msra.mxu0 0
    %585 = vmatprep.subr.bf16.mxu0 0
    %586 = vmatpush1.bf16.msra.mxu0 0
    %587 = vmatprep.subr.bf16.mxu0 0
    %588 = vmatpush1.bf16.msra.mxu0 0
    %589 = vmatprep.subr.bf16.mxu0 0
    %590 = vmatpush1.bf16.msra.mxu0 0
    %591 = vmatprep.mubr.bf16.mxu0 0
    %592 = vmatmul.mubr.bf16.gmra.mrb[0].mxu0 %v105
    %v593 = vpop.f32.mrb[0].mxu0
    %v594 = vadd.f32 %v509, %v593
    %v595 = vpop.f32.mrb[0].mxu0
    %v596 = vpop.f32.mrb[0].mxu0
    %v597 = vadd.f32 %v509, %v596
    %v598 = vpop.f32.mrb[0].mxu0
    %599 = vdwg.mxu0
    %v600 = vmul.f32 %v594, 0.01
    %v601 = vmul.f32 %v597, 0.01
    %v602 = vmax.f32 %v594, %v600
    %v603 = vmax.f32 %v597, %v601
    %v604 = vpack.c.bf16 %v603, %v602
    %s605 = scalar_lea.vmem [#allocation5], 64
    %v606 = vld [vmem:[%s605] sm:$0xf]
    %v607 = vld [vmem:[%s605 + $0x4] sm:$0xf]
    %v608 = vld [vmem:[%s605 + $0x8] sm:$0xf]
    %v609 = vld [vmem:[%s605 + $0xc] sm:$0xf]
    %v610 = vld [vmem:[%s605 + $0x10] sm:$0xf]
    %v611 = vld [vmem:[%s605 + $0x14] sm:$0xf]
    %v612 = vld [vmem:[%s605 + $0x18] sm:$0xf]
    %v613 = vld [vmem:[%s605 + $0x1c] sm:$0xf]
    %v614 = vld [vmem:[%s605 + $0x20] sm:$0xf]
    %v615 = vld [vmem:[%s605 + $0x24] sm:$0xf]
    %v616 = vld [vmem:[%s605 + $0x28] sm:$0xf]
    %v617 = vld [vmem:[%s605 + $0x2c] sm:$0xf]
    %v618 = vld [vmem:[%s605 + $0x30] sm:$0xf]
    %v619 = vld [vmem:[%s605 + $0x34] sm:$0xf]
    %v620 = vld [vmem:[%s605 + $0x38] sm:$0xf]
    %v621 = vld [vmem:[%s605 + $0x3c] sm:$0xf]
    %v622 = vlaneseq
    %v623 = vshrl.u32 %v622, 7
    %v624 = vsub.s32 0, %v623
    %v625 = vrot.slane %v487, %v624
    %v643 = vunpack.c.l.b16 %v606
    %v644 = vunpack.c.l.b16 %v607
    %v645 = vunpack.c.l.b16 %v608
    %v646 = vunpack.c.l.b16 %v609
    %v647 = vunpack.c.l.b16 %v610
    %v648 = vunpack.c.l.b16 %v611
    %v649 = vunpack.c.l.b16 %v612
    %v650 = vunpack.c.l.b16 %v613
    %v651 = vunpack.c.l.b16 %v614
    %v652 = vunpack.c.l.b16 %v615
    %v653 = vunpack.c.l.b16 %v616
    %v654 = vunpack.c.l.b16 %v617
    %v655 = vunpack.c.l.b16 %v618
    %v656 = vunpack.c.l.b16 %v619
    %v657 = vunpack.c.l.b16 %v620
    %v658 = vunpack.c.l.b16 %v621
    %v659 = vpack.c.b16 %v644, %v643
    %v660 = vpack.c.b16 %v646, %v645
    %v661 = vpack.c.b16 %v648, %v647
    %v662 = vpack.c.b16 %v650, %v649
    %v663 = vpack.c.b16 %v652, %v651
    %v664 = vpack.c.b16 %v654, %v653
    %v665 = vpack.c.b16 %v656, %v655
    %v666 = vpack.c.b16 %v658, %v657
    %675 = vmatprep.subr.bf16.mxu0 0
    %676 = vmatpush1.bf16.msra.mxu0 %v659
    %677 = vmatprep.subr.bf16.mxu0 0
    %678 = vmatpush1.bf16.msra.mxu0 %v660
    %679 = vmatprep.subr.bf16.mxu0 0
    %680 = vmatpush1.bf16.msra.mxu0 %v661
    %681 = vmatprep.subr.bf16.mxu0 0
    %682 = vmatpush1.bf16.msra.mxu0 %v662
    %683 = vmatprep.subr.bf16.mxu0 0
    %684 = vmatpush1.bf16.msra.mxu0 %v663
    %685 = vmatprep.subr.bf16.mxu0 0
    %686 = vmatpush1.bf16.msra.mxu0 %v664
    %687 = vmatprep.subr.bf16.mxu0 0
    %688 = vmatpush1.bf16.msra.mxu0 %v665
    %689 = vmatprep.subr.bf16.mxu0 0
    %690 = vmatpush1.bf16.msra.mxu0 %v666
    %691 = vmatprep.subr.bf16.mxu0 0
    %692 = vmatpush1.bf16.msra.mxu0 0
    %693 = vmatprep.subr.bf16.mxu0 0
    %694 = vmatpush1.bf16.msra.mxu0 0
    %695 = vmatprep.subr.bf16.mxu0 0
    %696 = vmatpush1.bf16.msra.mxu0 0
    %697 = vmatprep.subr.bf16.mxu0 0
    %698 = vmatpush1.bf16.msra.mxu0 0
    %699 = vmatprep.subr.bf16.mxu0 0
    %700 = vmatpush1.bf16.msra.mxu0 0
    %701 = vmatprep.subr.bf16.mxu0 0
    %702 = vmatpush1.bf16.msra.mxu0 0
    %703 = vmatprep.subr.bf16.mxu0 0
    %704 = vmatpush1.bf16.msra.mxu0 0
    %705 = vmatprep.subr.bf16.mxu0 0
    %706 = vmatpush1.bf16.msra.mxu0 0
    %707 = vmatprep.mubr.bf16.mxu0 0
    %708 = vmatmul.mubr.bf16.gmra.mrb[0].mxu0 %v604
    %v709 = vpop.f32.mrb[0].mxu0
    %v710 = vadd.f32 %v625, %v709
    %v711 = vpop.f32.mrb[0].mxu0
    %v712 = vpop.f32.mrb[0].mxu0
    %v713 = vadd.f32 %v625, %v712
    %v714 = vpop.f32.mrb[0].mxu0
    %715 = vdwg.mxu0
    %v716 = vmul.f32 %v710, 0.01
    %v717 = vmul.f32 %v713, 0.01
    %v718 = vmax.f32 %v710, %v716
    %v719 = vmax.f32 %v713, %v717
    %v720 = vpack.c.bf16 %v719, %v718
    %s721 = scalar_lea.vmem [#allocation7], 64
    %v722 = vld [vmem:[%s721] sm:$0xf]
    %v723 = vld [vmem:[%s721 + $0x4] sm:$0xf]
    %v724 = vld [vmem:[%s721 + $0x8] sm:$0xf]
    %v725 = vld [vmem:[%s721 + $0xc] sm:$0xf]
    %v726 = vld [vmem:[%s721 + $0x10] sm:$0xf]
    %v727 = vld [vmem:[%s721 + $0x14] sm:$0xf]
    %v728 = vld [vmem:[%s721 + $0x18] sm:$0xf]
    %v729 = vld [vmem:[%s721 + $0x1c] sm:$0xf]
    %v730 = vld [vmem:[%s721 + $0x20] sm:$0xf]
    %v731 = vld [vmem:[%s721 + $0x24] sm:$0xf]
    %v732 = vld [vmem:[%s721 + $0x28] sm:$0xf]
    %v733 = vld [vmem:[%s721 + $0x2c] sm:$0xf]
    %v734 = vld [vmem:[%s721 + $0x30] sm:$0xf]
    %v735 = vld [vmem:[%s721 + $0x34] sm:$0xf]
    %v736 = vld [vmem:[%s721 + $0x38] sm:$0xf]
    %v737 = vld [vmem:[%s721 + $0x3c] sm:$0xf]
    %v738 = vlaneseq
    %v739 = vshrl.u32 %v738, 7
    %v740 = vsub.s32 0, %v739
    %v741 = vrot.slane %v488, %v740
    %v759 = vunpack.c.l.b16 %v722
    %v760 = vunpack.c.l.b16 %v723
    %v761 = vunpack.c.l.b16 %v724
    %v762 = vunpack.c.l.b16 %v725
    %v763 = vunpack.c.l.b16 %v726
    %v764 = vunpack.c.l.b16 %v727
    %v765 = vunpack.c.l.b16 %v728
    %v766 = vunpack.c.l.b16 %v729
    %v767 = vunpack.c.l.b16 %v730
    %v768 = vunpack.c.l.b16 %v731
    %v769 = vunpack.c.l.b16 %v732
    %v770 = vunpack.c.l.b16 %v733
    %v771 = vunpack.c.l.b16 %v734
    %v772 = vunpack.c.l.b16 %v735
    %v773 = vunpack.c.l.b16 %v736
    %v774 = vunpack.c.l.b16 %v737
    %v775 = vpack.c.b16 %v760, %v759
    %v776 = vpack.c.b16 %v762, %v761
    %v777 = vpack.c.b16 %v764, %v763
    %v778 = vpack.c.b16 %v766, %v765
    %v779 = vpack.c.b16 %v768, %v767
    %v780 = vpack.c.b16 %v770, %v769
    %v781 = vpack.c.b16 %v772, %v771
    %v782 = vpack.c.b16 %v774, %v773
    %791 = vmatprep.subr.bf16.mxu0 0
    %792 = vmatpush1.bf16.msra.mxu0 %v775
    %793 = vmatprep.subr.bf16.mxu0 0
    %794 = vmatpush1.bf16.msra.mxu0 %v776
    %795 = vmatprep.subr.bf16.mxu0 0
    %796 = vmatpush1.bf16.msra.mxu0 %v777
    %797 = vmatprep.subr.bf16.mxu0 0
    %798 = vmatpush1.bf16.msra.mxu0 %v778
    %799 = vmatprep.subr.bf16.mxu0 0
    %800 = vmatpush1.bf16.msra.mxu0 %v779
    %801 = vmatprep.subr.bf16.mxu0 0
    %802 = vmatpush1.bf16.msra.mxu0 %v780
    %803 = vmatprep.subr.bf16.mxu0 0
    %804 = vmatpush1.bf16.msra.mxu0 %v781
    %805 = vmatprep.subr.bf16.mxu0 0
    %806 = vmatpush1.bf16.msra.mxu0 %v782
    %807 = vmatprep.subr.bf16.mxu0 0
    %808 = vmatpush1.bf16.msra.mxu0 0
    %809 = vmatprep.subr.bf16.mxu0 0
    %810 = vmatpush1.bf16.msra.mxu0 0
    %811 = vmatprep.subr.bf16.mxu0 0
    %812 = vmatpush1.bf16.msra.mxu0 0
    %813 = vmatprep.subr.bf16.mxu0 0
    %814 = vmatpush1.bf16.msra.mxu0 0
    %815 = vmatprep.subr.bf16.mxu0 0
    %816 = vmatpush1.bf16.msra.mxu0 0
    %817 = vmatprep.subr.bf16.mxu0 0
    %818 = vmatpush1.bf16.msra.mxu0 0
    %819 = vmatprep.subr.bf16.mxu0 0
    %820 = vmatpush1.bf16.msra.mxu0 0
    %821 = vmatprep.subr.bf16.mxu0 0
    %822 = vmatpush1.bf16.msra.mxu0 0
    %823 = vmatprep.mubr.bf16.mxu0 0
    %824 = vmatmul.mubr.bf16.gmra.mrb[0].mxu0 %v720
    %v825 = vpop.f32.mrb[0].mxu0
    %v826 = vadd.f32 %v741, %v825
    %v827 = vpop.f32.mrb[0].mxu0
    %v828 = vpop.f32.mrb[0].mxu0
    %v829 = vadd.f32 %v741, %v828
    %v830 = vpop.f32.mrb[0].mxu0
    %831 = vdwg.mxu0
    %s832 = scalar_lea.vmem [#allocation8], 16
    %833 = vst [vmem:[%s832] sm:$0xff] %v826
    %834 = vst [vmem:[%s832 + $0x8] sm:$0xff] %v829
    %835 = vmax.xlane.f32.xlu0 %v826
    %v836 = vpop.xlane.xlu0 %835
    %837 = vmax.xlane.f32.xlu0 %v829
    %v838 = vpop.xlane.xlu0 %837
    %v839 = vsub.f32 %v826, %v836
    %v840 = vsub.f32 %v829, %v838
    %v841 = vmul.f32 %v839, 1.442695
    %v842 = vpow.pop %v841
    %v843 = vmul.f32 %v840, 1.442695
    %v844 = vpow.pop %v843
    %845 = vadd.xlane.f32.xlu0 %v842
    %v846 = vpop.xlane.xlu0 %845
    %847 = vadd.xlane.f32.xlu0 %v844
    %v848 = vpop.xlane.xlu0 %847
    %v849 = vlog2.pop %v846
    %v850 = vmul.f32 %v849, 0.6931472
    %v851 = vlog2.pop %v848
    %v852 = vmul.f32 %v851, 0.6931472
    %v853 = vadd.f32 %v836, %v850
    %v854 = vadd.f32 %v838, %v852
    %s855 = scalar_lea.vmem %s5, 16
    %v856 = vld [vmem:[%s855] sm:$0xff]
    %v857 = vld [vmem:[%s855 + $0x8] sm:$0xff]
    %858 = vset.pattern.permute.xlu0 0
    %859 = vperm.xlu0 %858, %v856
    %v860 = vpop.permute.xlu0 %859
    %861 = vset.pattern.permute.xlu0 0
    %862 = vperm.xlu0 %861, %v857
    %v863 = vpop.permute.xlu0 %862
    %vm864 = vcmp.eq.s32.totalorder %v451, %v860
    %vm865 = vcmp.eq.s32.totalorder %v451, %v863
    %v866 = vsel %vm864, 1, 0
    %v867 = vsel %vm865, 1, 0
    %v868 = vcvt.s32.f32 %v866
    %v869 = vcvt.s32.f32 %v867
    %v870 = vmul.f32 %v868, %v826
    %v871 = vmul.f32 %v869, %v829
    %872 = vadd.xlane.f32.xlu0 %v870
    %v873 = vpop.xlane.xlu0 %872
    %874 = vadd.xlane.f32.xlu0 %v871
    %v875 = vpop.xlane.xlu0 %874
    %v876 = vsub.f32 %v853, %v873
    %v877 = vsub.f32 %v854, %v875
    %v878 = vmul.f32 %v876, %v73
    %v879 = vmul.f32 %v877, %v74
    %v880 = vsel %vm474, %v878, 0.0
    %v881 = vsel %vm474, %v879, 0.0
    %v882 = vadd.f32 %v880, %v881
    %v883 = vrot.slane %v882, 4
    %v884 = vadd.f32 %v882, %v883
    %v885 = vrot.slane %v884, 2
    %v886 = vadd.f32 %v884, %v885
    %v887 = vrot.slane %v886, 1
    %v888 = vadd.f32 %v886, %v887
    %s889 = scalar_lea.vmem %s8, 1
    %890 = vst.msk [vmem:[%s889] sm:$0x1] %vm484, %v888
    // Predicated region
    $region42: #{_ensemble_forward.1} parent=1 // pred_check
      _
    $region43: #{_ensemble_forward.1} parent=1 // pred_check_branch
      %892 = sbr.rel (0) target = $region45
    $region44: #{_ensemble_forward.1} parent=1 // pred_region
      %s894 = ssub.s32 512, 512
      %895 = vsyncadd [#allocation4], %s894
      %s896 = sshll.u32 [#allocation8], 4
      %s897 = int_to_ptr.vmem [resolvable:$true] %s896
      %902 = dma.vmem_to_hbm [thread:$0]  %s897, 512, %s7, [#allocation4], 128, 128, 8
    $region45: #{_ensemble_forward.1} parent=1 // pred_fallthru
      _
    // Predicated region
    $region46: #{_ensemble_forward.1} parent=1 // pred_check
      _
    $region47: #{_ensemble_forward.1} parent=1 // pred_check_branch
      %904 = sbr.rel (0) target = $region49
    $region48: #{_ensemble_forward.1} parent=1 // pred_region
      _
    $region49: #{_ensemble_forward.1} parent=1 // pred_fallthru
      _
    // Predicated region
    $region50: #{_ensemble_forward.1} parent=1 // pred_check
      _
    $region51: #{_ensemble_forward.1} parent=1 // pred_check_branch
      %906 = sbr.rel (0) target = $region53
    $region52: #{_ensemble_forward.1} parent=1 // pred_region
      %907 = dma.done [#allocation4], 512
    $region53: #{_ensemble_forward.1} parent=1 // pred_fallthru
      _
    // Predicated region
    $region54: #{_ensemble_forward.1} parent=1 // pred_check
      _
    $region55: #{_ensemble_forward.1} parent=1 // pred_check_branch
      %909 = sbr.rel (0) target = $region57
    $region56: #{_ensemble_forward.1} parent=1 // pred_region
      _
    $region57: #{_ensemble_forward.1} parent=1 // pred_fallthru
      _
    %910 = vsyncpa [#allocation3], 1
    %911 = vsyncpa [#allocation6], 1
    %912 = vsyncpa [#allocation4], 1

</llo_original>
